<compile_context>
chip_gen: v6e
topology: v6e:2x2x1
jax: 0.10.0
libtpu: 0.0.40
codegen_flags: <defaults>
</compile_context>

<pallas_src>
import functools

import jax
import jax.numpy as jnp
from jax.experimental import pallas as pl
from jax.experimental.pallas import tpu as pltpu


def _round_up(x, m):
    return (x + m - 1) // m * m


def _device_kind():
    try:
        return jax.devices()[0].device_kind.lower()
    except Exception:
        return ""


def _supports_bf16_vpu():
    # v6e / v7x have bf16 VALUs; v2-v5 do not. Unknown chips default to True
    # (bf16 accumulation stays numerically exact for counts either way).
    kind = _device_kind()
    return not any(t in kind for t in ("v2", "v3", "v4", "v5"))


def _tensorcores_per_chip():
    kind = _device_kind()
    return 2 if ("v7" in kind or "7x" in kind) else 1


def _logreg_kernel(s_ref, rhs_ref, out_ref, *, K, a_pad, acc_dtype):
    TB = s_ref.shape[0]
    D = rhs_ref.shape[0]
    mat_dtype = rhs_ref.dtype

    s = s_ref[...]                                            # (TB, K) int32
    lane = jax.lax.broadcasted_iota(jnp.int32, (TB, D), 1)    # (TB, D), hoisted

    # One-hot count matrix. K is small & static -> unrolled Python loop.
    counts = jnp.zeros((TB, D), acc_dtype)
    for k in range(K):
        idx = s[:, k:k + 1]                                   # (TB, 1)
        counts = counts + (idx == lane).astype(acc_dtype)
    c = counts.astype(mat_dtype)                              # no-op if dtypes match

    # Single fused MXU pass:  C @ [A | 0 | mu-col | 0]  ->  (TB, a_pad + 128) f32.
    fused = jnp.dot(c, rhs_ref[...], preferred_element_type=jnp.float32)

    # A[S].sum(1): tile-aligned slice; zero-padded columns contribute nothing.
    AS = fused[:, :a_pad]
    V = jnp.sum(AS * AS, axis=1, keepdims=True)               # (TB, 1)
    # mu lives alone in the aligned trailing 128-col block -> full-block rowsum == M.
    M = jnp.sum(fused[:, a_pad:a_pad + 128], axis=1, keepdims=True)

    res = jax.nn.sigmoid(M * jax.lax.rsqrt(jnp.float32(K) + V))   # (TB, 1)
    out_ref[...] = res                                        # 4 B / element writeback


def logistic_regression_forward(S, mu, A, *, block_b=512, use_bf16=True):
    """S: (B, K) int, mu: (mu_dim,) f32, A: (input_dim, input_dim) f32 -> (B,) f32.

    Note: indices >= input_dim (but < the padded index range) contribute zero
    (defined-to-zero), whereas the PyTorch reference would index out of bounds.
    """
    B, K = S.shape
    mu_dim = mu.shape[0]
    input_dim = A.shape[0]

    # Index/row dim of the one-hot matrix (covers both mu and A rows).
    D = _round_up(max(input_dim, mu_dim), 128)
    # Column layout: [A (input_dim) | 0-pad to a_pad | mu column block (128)].
    a_pad = _round_up(input_dim, 128)
    n_pad = a_pad + 128

    rhs_dtype = jnp.bfloat16 if use_bf16 else jnp.float32
    rhs = jnp.zeros((D, n_pad), jnp.float32)
    rhs = rhs.at[:input_dim, :input_dim].set(A.astype(jnp.float32))
    rhs = rhs.at[:mu_dim, a_pad].set(mu.astype(jnp.float32))
    rhs = rhs.astype(rhs_dtype)

    # Counts accumulation dtype: bf16 only when the VPU is bf16-native.
    if rhs_dtype == jnp.bfloat16 and _supports_bf16_vpu():
        acc_dtype = jnp.bfloat16
    else:
        acc_dtype = jnp.float32

    # Row tile: big (default 512) to amortize per-step pipeline overhead.
    B8 = _round_up(B, 8)
    TB = min(_round_up(block_b, 8), B8)
    # v7x megacore: make sure both TensorCores get at least one grid step.
    if _tensorcores_per_chip() >= 2 and B8 // TB < 2 and TB >= 16:
        TB = _round_up(TB // 2, 8)
    B_pad = _round_up(B, TB)
    if B_pad != B:
        S = jnp.concatenate(
            [S, jnp.zeros((B_pad - B, K), dtype=S.dtype)], axis=0)
    grid = (B_pad // TB,)

    # Raise the scoped VMEM limit only if the estimate exceeds the 32 MiB default.
    rhs_bytes = D * n_pad * jnp.dtype(rhs_dtype).itemsize
    est_bytes = (rhs_bytes                                        # single-buffered rhs
                 + 2 * TB * K * 4                                 # S (double-buffered)
                 + 2 * TB * 4                                     # out (double-buffered)
                 + TB * D * (jnp.dtype(acc_dtype).itemsize + 4)   # counts + compare temps
                 + TB * n_pad * 4)                                # fused f32 MXU output
    vmem_limit = None
    if est_bytes > 32 * 2**20:
        cap = 64 * 2**20
        try:
            cap = int(pltpu.get_tpu_info().vmem_capacity_bytes)
        except Exception:
            pass
        vmem_limit = int(min(cap, 2 * est_bytes))

    kernel = functools.partial(_logreg_kernel, K=K, a_pad=a_pad, acc_dtype=acc_dtype)

    def build(single_buffer_rhs):
        if single_buffer_rhs:
            # Constant index_map -> fetched once, VMEM-resident; single buffer.
            rhs_spec = pl.BlockSpec((D, n_pad), lambda i: (0, 0),
                                    pipeline_mode=pl.Buffered(1))
        else:
            rhs_spec = pl.BlockSpec((D, n_pad), lambda i: (0, 0))
        cp_kwargs = dict(dimension_semantics=("parallel",))
        if vmem_limit is not None:
            cp_kwargs["vmem_limit_bytes"] = vmem_limit
        return pl.pallas_call(
            kernel,
            out_shape=jax.ShapeDtypeStruct((B_pad, 1), jnp.float32),
            grid=grid,
            in_specs=[
                pl.BlockSpec((TB, K), lambda i: (i, 0)),
                rhs_spec,
            ],
            out_specs=pl.BlockSpec((TB, 1), lambda i: (i, 0)),
            compiler_params=pltpu.CompilerParams(**cp_kwargs),
        )

    S_i32 = S.astype(jnp.int32)
    try:
        out = build(True)(S_i32, rhs)
    except Exception:
        # Fallback if this jax version rejects pipeline_mode=pl.Buffered(1).
        out = build(False)(S_i32, rhs)
    return out[:B, 0]


def _reference_forward(S, mu, A):
    K = S.shape[1]
    M = mu[S].sum(axis=1)
    V = jnp.sum(jnp.square(A[S].sum(axis=1)), axis=1)
    return jax.nn.sigmoid(M / jnp.sqrt(K + V))


if __name__ == "__main__":
    input_dim = 128
    mu_dim = 128
    B, K = 8, 8

    key = jax.random.PRNGKey(0)
    k_mu, k_s = jax.random.split(key)

    # Parameters (deterministic init; __init__ sets A to the identity).
    mu = jax.random.normal(k_mu, (mu_dim,), dtype=jnp.float32)
    A = jnp.eye(input_dim, dtype=jnp.float32)

    # Integer index input S (indices valid for both mu and A rows).
    S = jax.random.randint(k_s, (B, K), 0, min(mu_dim, input_dim), dtype=jnp.int32)

    ref = _reference_forward(S, mu, A)

    # Default (bf16 rhs) path: counts exact, A/mu rounded to bf16 -> loose tol.
    out_bf16 = jax.block_until_ready(logistic_regression_forward(S, mu, A))
    assert out_bf16.shape == (B,)
    assert jnp.allclose(out_bf16, ref, atol=1e-2, rtol=1e-2), (out_bf16, ref)

    # Full-precision path: must match the reference tightly.
    out_f32 = jax.block_until_ready(
        logistic_regression_forward(S, mu, A, use_bf16=False))
    assert out_f32.shape == (B,)
    assert jnp.allclose(out_f32, ref, atol=1e-5, rtol=1e-5), (out_f32, ref)

    print("KERNEL_OK")
</pallas_src>

<mosaic_0001>
module attributes {stable_mosaic.version = 11 : i64} {
  func.func @_logreg_kernel(%arg0: i32, %arg1: memref<8x8xi32, #tpu.memory_space<vmem>>, %arg2: memref<128x256xbf16, #tpu.memory_space<vmem>>, %arg3: memref<8x1xf32, #tpu.memory_space<vmem>>) attributes {dimension_semantics = [#tpu.dimension_semantics<parallel>], iteration_bounds = array<i64: 1>, scalar_prefetch = 0 : i64, scratch_operands = 0 : i64, tpu.core_type = #tpu.core_type<tc>, window_params = [{transform_indices = @transform_0, window_bounds = array<i64: 8, 8>}, {pipeline_mode = #tpu.pipeline_mode<synchronous>, transform_indices = @transform_1, window_bounds = array<i64: 128, 256>}, {transform_indices = @transform_2, window_bounds = array<i64: 8, 1>}]} {
    %c0 = arith.constant 0 : index
    %c0_0 = arith.constant 0 : index
    %0 = vector.load %arg1[%c0, %c0_0] : memref<8x8xi32, #tpu.memory_space<vmem>>, vector<8x8xi32>
    %1 = tpu.iota {dimensions = array<i32: 1>} : vector<8x128xi32>
    %cst = arith.constant 0.000000e+00 : bf16
    %2 = vector.broadcast %cst : bf16 to vector<8x128xbf16>
    %3 = vector.extract_strided_slice %0 {offsets = [0, 0], sizes = [8, 1], strides = [1, 1]} : vector<8x8xi32> to vector<8x1xi32>
    %4 = vector.broadcast %3 : vector<8x1xi32> to vector<8x128xi32>
    %5 = arith.cmpi eq, %4, %1 : vector<8x128xi32>
    %6 = arith.extui %5 : vector<8x128xi1> to vector<8x128xi32>
    %7 = arith.sitofp %6 : vector<8x128xi32> to vector<8x128xf32>
    %8 = arith.truncf %7 : vector<8x128xf32> to vector<8x128xbf16>
    %9 = arith.addf %2, %8 : vector<8x128xbf16>
    %10 = vector.extract_strided_slice %0 {offsets = [0, 1], sizes = [8, 1], strides = [1, 1]} : vector<8x8xi32> to vector<8x1xi32>
    %11 = vector.broadcast %10 : vector<8x1xi32> to vector<8x128xi32>
    %12 = arith.cmpi eq, %11, %1 : vector<8x128xi32>
    %13 = arith.extui %12 : vector<8x128xi1> to vector<8x128xi32>
    %14 = arith.sitofp %13 : vector<8x128xi32> to vector<8x128xf32>
    %15 = arith.truncf %14 : vector<8x128xf32> to vector<8x128xbf16>
    %16 = arith.addf %9, %15 : vector<8x128xbf16>
    %17 = vector.extract_strided_slice %0 {offsets = [0, 2], sizes = [8, 1], strides = [1, 1]} : vector<8x8xi32> to vector<8x1xi32>
    %18 = vector.broadcast %17 : vector<8x1xi32> to vector<8x128xi32>
    %19 = arith.cmpi eq, %18, %1 : vector<8x128xi32>
    %20 = arith.extui %19 : vector<8x128xi1> to vector<8x128xi32>
    %21 = arith.sitofp %20 : vector<8x128xi32> to vector<8x128xf32>
    %22 = arith.truncf %21 : vector<8x128xf32> to vector<8x128xbf16>
    %23 = arith.addf %16, %22 : vector<8x128xbf16>
    %24 = vector.extract_strided_slice %0 {offsets = [0, 3], sizes = [8, 1], strides = [1, 1]} : vector<8x8xi32> to vector<8x1xi32>
    %25 = vector.broadcast %24 : vector<8x1xi32> to vector<8x128xi32>
    %26 = arith.cmpi eq, %25, %1 : vector<8x128xi32>
    %27 = arith.extui %26 : vector<8x128xi1> to vector<8x128xi32>
    %28 = arith.sitofp %27 : vector<8x128xi32> to vector<8x128xf32>
    %29 = arith.truncf %28 : vector<8x128xf32> to vector<8x128xbf16>
    %30 = arith.addf %23, %29 : vector<8x128xbf16>
    %31 = vector.extract_strided_slice %0 {offsets = [0, 4], sizes = [8, 1], strides = [1, 1]} : vector<8x8xi32> to vector<8x1xi32>
    %32 = vector.broadcast %31 : vector<8x1xi32> to vector<8x128xi32>
    %33 = arith.cmpi eq, %32, %1 : vector<8x128xi32>
    %34 = arith.extui %33 : vector<8x128xi1> to vector<8x128xi32>
    %35 = arith.sitofp %34 : vector<8x128xi32> to vector<8x128xf32>
    %36 = arith.truncf %35 : vector<8x128xf32> to vector<8x128xbf16>
    %37 = arith.addf %30, %36 : vector<8x128xbf16>
    %38 = vector.extract_strided_slice %0 {offsets = [0, 5], sizes = [8, 1], strides = [1, 1]} : vector<8x8xi32> to vector<8x1xi32>
    %39 = vector.broadcast %38 : vector<8x1xi32> to vector<8x128xi32>
    %40 = arith.cmpi eq, %39, %1 : vector<8x128xi32>
    %41 = arith.extui %40 : vector<8x128xi1> to vector<8x128xi32>
    %42 = arith.sitofp %41 : vector<8x128xi32> to vector<8x128xf32>
    %43 = arith.truncf %42 : vector<8x128xf32> to vector<8x128xbf16>
    %44 = arith.addf %37, %43 : vector<8x128xbf16>
    %45 = vector.extract_strided_slice %0 {offsets = [0, 6], sizes = [8, 1], strides = [1, 1]} : vector<8x8xi32> to vector<8x1xi32>
    %46 = vector.broadcast %45 : vector<8x1xi32> to vector<8x128xi32>
    %47 = arith.cmpi eq, %46, %1 : vector<8x128xi32>
    %48 = arith.extui %47 : vector<8x128xi1> to vector<8x128xi32>
    %49 = arith.sitofp %48 : vector<8x128xi32> to vector<8x128xf32>
    %50 = arith.truncf %49 : vector<8x128xf32> to vector<8x128xbf16>
    %51 = arith.addf %44, %50 : vector<8x128xbf16>
    %52 = vector.extract_strided_slice %0 {offsets = [0, 7], sizes = [8, 1], strides = [1, 1]} : vector<8x8xi32> to vector<8x1xi32>
    %53 = vector.broadcast %52 : vector<8x1xi32> to vector<8x128xi32>
    %54 = arith.cmpi eq, %53, %1 : vector<8x128xi32>
    %55 = arith.extui %54 : vector<8x128xi1> to vector<8x128xi32>
    %56 = arith.sitofp %55 : vector<8x128xi32> to vector<8x128xf32>
    %57 = arith.truncf %56 : vector<8x128xf32> to vector<8x128xbf16>
    %58 = arith.addf %51, %57 : vector<8x128xbf16>
    %c0_1 = arith.constant 0 : index
    %c0_2 = arith.constant 0 : index
    %59 = vector.load %arg2[%c0_1, %c0_2] : memref<128x256xbf16, #tpu.memory_space<vmem>>, vector<128x256xbf16>
    %cst_3 = arith.constant dense<0.000000e+00> : vector<8x256xf32>
    %60 = tpu.matmul %58, %59, %cst_3 {dimension_numbers = #tpu.dot_dimension_numbers<[1], [0], [0], [1], [0, 0, 1, 1], [], []>} : vector<8x128xbf16>, vector<128x256xbf16>, vector<8x256xf32> -> vector<8x256xf32>
    %61 = vector.extract_strided_slice %60 {offsets = [0, 0], sizes = [8, 128], strides = [1, 1]} : vector<8x256xf32> to vector<8x128xf32>
    %62 = arith.mulf %61, %61 : vector<8x128xf32>
    %cst_4 = arith.constant dense<0.000000e+00> : vector<8xf32>
    %63 = vector.multi_reduction <add>, %62, %cst_4 [1] : vector<8x128xf32> to vector<8xf32>
    %64 = vector.shape_cast %63 : vector<8xf32> to vector<8x1xf32>
    %65 = vector.extract_strided_slice %60 {offsets = [0, 128], sizes = [8, 128], strides = [1, 1]} : vector<8x256xf32> to vector<8x128xf32>
    %cst_5 = arith.constant dense<0.000000e+00> : vector<8xf32>
    %66 = vector.multi_reduction <add>, %65, %cst_5 [1] : vector<8x128xf32> to vector<8xf32>
    %67 = vector.shape_cast %66 : vector<8xf32> to vector<8x1xf32>
    %cst_6 = arith.constant 8.000000e+00 : f32
    %68 = vector.broadcast %cst_6 : f32 to vector<8x1xf32>
    %69 = arith.addf %68, %64 : vector<8x1xf32>
    %70 = math.rsqrt %69 : vector<8x1xf32>
    %71 = arith.mulf %67, %70 : vector<8x1xf32>
    %72 = arith.negf %71 : vector<8x1xf32>
    %73 = math.exp %72 : vector<8x1xf32>
    %cst_7 = arith.constant 1.000000e+00 : f32
    %74 = vector.broadcast %cst_7 : f32 to vector<8x1xf32>
    %75 = arith.addf %74, %73 : vector<8x1xf32>
    %76 = arith.divf %74, %75 : vector<8x1xf32>
    %c0_8 = arith.constant 0 : index
    %c0_9 = arith.constant 0 : index
    %77 = vector.load %arg3[%c0_8, %c0_9] : memref<8x1xf32, #tpu.memory_space<vmem>>, vector<8x1xf32>
    tpu.vector_store %arg3[%c0_8, %c0_9], %76 {strides = array<i32>} : memref<8x1xf32, #tpu.memory_space<vmem>>, vector<8x1xf32>,
    return
  }
  func.func @transform_0(%arg0: i32) -> (i32, i32) {
    %c0_i32 = arith.constant 0 : i32
    %c0_i32_0 = arith.constant 0 : i32
    return %arg0, %c0_i32 : i32, i32
  }
  func.func @transform_1(%arg0: i32) -> (i32, i32) {
    %c0_i32 = arith.constant 0 : i32
    %c0_i32_0 = arith.constant 0 : i32
    %c0_i32_1 = arith.constant 0 : i32
    return %c0_i32, %c0_i32_0 : i32, i32
  }
  func.func @transform_2(%arg0: i32) -> (i32, i32) {
    %c0_i32 = arith.constant 0 : i32
    %c0_i32_0 = arith.constant 0 : i32
    return %arg0, %c0_i32 : i32, i32
  }
}

module attributes {stable_mosaic.version = 11 : i64} {
  func.func @_logreg_kernel(%arg0: i32, %arg1: memref<8x8xi32, #tpu.memory_space<vmem>>, %arg2: memref<128x256xbf16, #tpu.memory_space<vmem>>, %arg3: memref<8x1xf32, #tpu.memory_space<vmem>>) attributes {dimension_semantics = [#tpu.dimension_semantics<parallel>], iteration_bounds = array<i64: 1>, scalar_prefetch = 0 : i64, scratch_operands = 0 : i64, tpu.core_type = #tpu.core_type<tc>, window_params = [{transform_indices = @transform_0, window_bounds = array<i64: 8, 8>}, {pipeline_mode = #tpu.pipeline_mode<synchronous>, transform_indices = @transform_1, window_bounds = array<i64: 128, 256>}, {transform_indices = @transform_2, window_bounds = array<i64: 8, 1>}]} {
    %c0 = arith.constant 0 : index
    %c0_0 = arith.constant 0 : index
    %0 = vector.load %arg1[%c0, %c0_0] : memref<8x8xi32, #tpu.memory_space<vmem>>, vector<8x8xi32>
    %1 = tpu.iota {dimensions = array<i32: 1>} : vector<8x128xi32>
    %cst = arith.constant 0.000000e+00 : bf16
    %2 = vector.broadcast %cst : bf16 to vector<8x128xbf16>
    %3 = vector.extract_strided_slice %0 {offsets = [0, 0], sizes = [8, 1], strides = [1, 1]} : vector<8x8xi32> to vector<8x1xi32>
    %4 = vector.broadcast %3 : vector<8x1xi32> to vector<8x128xi32>
    %5 = arith.cmpi eq, %4, %1 : vector<8x128xi32>
    %6 = arith.extui %5 : vector<8x128xi1> to vector<8x128xi32>
    %7 = arith.sitofp %6 : vector<8x128xi32> to vector<8x128xf32>
    %8 = arith.truncf %7 : vector<8x128xf32> to vector<8x128xbf16>
    %9 = arith.addf %2, %8 : vector<8x128xbf16>
    %10 = vector.extract_strided_slice %0 {offsets = [0, 1], sizes = [8, 1], strides = [1, 1]} : vector<8x8xi32> to vector<8x1xi32>
    %11 = vector.broadcast %10 : vector<8x1xi32> to vector<8x128xi32>
    %12 = arith.cmpi eq, %11, %1 : vector<8x128xi32>
    %13 = arith.extui %12 : vector<8x128xi1> to vector<8x128xi32>
    %14 = arith.sitofp %13 : vector<8x128xi32> to vector<8x128xf32>
    %15 = arith.truncf %14 : vector<8x128xf32> to vector<8x128xbf16>
    %16 = arith.addf %9, %15 : vector<8x128xbf16>
    %17 = vector.extract_strided_slice %0 {offsets = [0, 2], sizes = [8, 1], strides = [1, 1]} : vector<8x8xi32> to vector<8x1xi32>
    %18 = vector.broadcast %17 : vector<8x1xi32> to vector<8x128xi32>
    %19 = arith.cmpi eq, %18, %1 : vector<8x128xi32>
    %20 = arith.extui %19 : vector<8x128xi1> to vector<8x128xi32>
    %21 = arith.sitofp %20 : vector<8x128xi32> to vector<8x128xf32>
    %22 = arith.truncf %21 : vector<8x128xf32> to vector<8x128xbf16>
    %23 = arith.addf %16, %22 : vector<8x128xbf16>
    %24 = vector.extract_strided_slice %0 {offsets = [0, 3], sizes = [8, 1], strides = [1, 1]} : vector<8x8xi32> to vector<8x1xi32>
    %25 = vector.broadcast %24 : vector<8x1xi32> to vector<8x128xi32>
    %26 = arith.cmpi eq, %25, %1 : vector<8x128xi32>
    %27 = arith.extui %26 : vector<8x128xi1> to vector<8x128xi32>
    %28 = arith.sitofp %27 : vector<8x128xi32> to vector<8x128xf32>
    %29 = arith.truncf %28 : vector<8x128xf32> to vector<8x128xbf16>
    %30 = arith.addf %23, %29 : vector<8x128xbf16>
    %31 = vector.extract_strided_slice %0 {offsets = [0, 4], sizes = [8, 1], strides = [1, 1]} : vector<8x8xi32> to vector<8x1xi32>
    %32 = vector.broadcast %31 : vector<8x1xi32> to vector<8x128xi32>
    %33 = arith.cmpi eq, %32, %1 : vector<8x128xi32>
    %34 = arith.extui %33 : vector<8x128xi1> to vector<8x128xi32>
    %35 = arith.sitofp %34 : vector<8x128xi32> to vector<8x128xf32>
    %36 = arith.truncf %35 : vector<8x128xf32> to vector<8x128xbf16>
    %37 = arith.addf %30, %36 : vector<8x128xbf16>
    %38 = vector.extract_strided_slice %0 {offsets = [0, 5], sizes = [8, 1], strides = [1, 1]} : vector<8x8xi32> to vector<8x1xi32>
    %39 = vector.broadcast %38 : vector<8x1xi32> to vector<8x128xi32>
    %40 = arith.cmpi eq, %39, %1 : vector<8x128xi32>
    %41 = arith.extui %40 : vector<8x128xi1> to vector<8x128xi32>
    %42 = arith.sitofp %41 : vector<8x128xi32> to vector<8x128xf32>
    %43 = arith.truncf %42 : vector<8x128xf32> to vector<8x128xbf16>
    %44 = arith.addf %37, %43 : vector<8x128xbf16>
    %45 = vector.extract_strided_slice %0 {offsets = [0, 6], sizes = [8, 1], strides = [1, 1]} : vector<8x8xi32> to vector<8x1xi32>
    %46 = vector.broadcast %45 : vector<8x1xi32> to vector<8x128xi32>
    %47 = arith.cmpi eq, %46, %1 : vector<8x128xi32>
    %48 = arith.extui %47 : vector<8x128xi1> to vector<8x128xi32>
    %49 = arith.sitofp %48 : vector<8x128xi32> to vector<8x128xf32>
    %50 = arith.truncf %49 : vector<8x128xf32> to vector<8x128xbf16>
    %51 = arith.addf %44, %50 : vector<8x128xbf16>
    %52 = vector.extract_strided_slice %0 {offsets = [0, 7], sizes = [8, 1], strides = [1, 1]} : vector<8x8xi32> to vector<8x1xi32>
    %53 = vector.broadcast %52 : vector<8x1xi32> to vector<8x128xi32>
    %54 = arith.cmpi eq, %53, %1 : vector<8x128xi32>
    %55 = arith.extui %54 : vector<8x128xi1> to vector<8x128xi32>
    %56 = arith.sitofp %55 : vector<8x128xi32> to vector<8x128xf32>
    %57 = arith.truncf %56 : vector<8x128xf32> to vector<8x128xbf16>
    %58 = arith.addf %51, %57 : vector<8x128xbf16>
    %c0_1 = arith.constant 0 : index
    %c0_2 = arith.constant 0 : index
    %59 = vector.load %arg2[%c0_1, %c0_2] : memref<128x256xbf16, #tpu.memory_space<vmem>>, vector<128x256xbf16>
    %cst_3 = arith.constant dense<0.000000e+00> : vector<8x256xf32>
    %60 = tpu.matmul %58, %59, %cst_3 {dimension_numbers = #tpu.dot_dimension_numbers<[1], [0], [0], [1], [0, 0, 1, 1], [], []>} : vector<8x128xbf16>, vector<128x256xbf16>, vector<8x256xf32> -> vector<8x256xf32>
    %61 = vector.extract_strided_slice %60 {offsets = [0, 0], sizes = [8, 128], strides = [1, 1]} : vector<8x256xf32> to vector<8x128xf32>
    %62 = arith.mulf %61, %61 : vector<8x128xf32>
    %cst_4 = arith.constant dense<0.000000e+00> : vector<8xf32>
    %63 = vector.multi_reduction <add>, %62, %cst_4 [1] : vector<8x128xf32> to vector<8xf32>
    %64 = vector.shape_cast %63 : vector<8xf32> to vector<8x1xf32>
    %65 = vector.extract_strided_slice %60 {offsets = [0, 128], sizes = [8, 128], strides = [1, 1]} : vector<8x256xf32> to vector<8x128xf32>
    %cst_5 = arith.constant dense<0.000000e+00> : vector<8xf32>
    %66 = vector.multi_reduction <add>, %65, %cst_5 [1] : vector<8x128xf32> to vector<8xf32>
    %67 = vector.shape_cast %66 : vector<8xf32> to vector<8x1xf32>
    %cst_6 = arith.constant 8.000000e+00 : f32
    %68 = vector.broadcast %cst_6 : f32 to vector<8x1xf32>
    %69 = arith.addf %68, %64 : vector<8x1xf32>
    %70 = math.rsqrt %69 : vector<8x1xf32>
    %71 = arith.mulf %67, %70 : vector<8x1xf32>
    %72 = arith.negf %71 : vector<8x1xf32>
    %73 = math.exp %72 : vector<8x1xf32>
    %cst_7 = arith.constant 1.000000e+00 : f32
    %74 = vector.broadcast %cst_7 : f32 to vector<8x1xf32>
    %75 = arith.addf %74, %73 : vector<8x1xf32>
    %76 = arith.divf %74, %75 : vector<8x1xf32>
    %c0_8 = arith.constant 0 : index
    %c0_9 = arith.constant 0 : index
    %77 = vector.load %arg3[%c0_8, %c0_9] : memref<8x1xf32, #tpu.memory_space<vmem>>, vector<8x1xf32>
    tpu.vector_store %arg3[%c0_8, %c0_9], %76 {strides = array<i32>} : memref<8x1xf32, #tpu.memory_space<vmem>>, vector<8x1xf32>,
    return
  }
  func.func @transform_0(%arg0: i32) -> (i32, i32) {
    %c0_i32 = arith.constant 0 : i32
    %c0_i32_0 = arith.constant 0 : i32
    return %arg0, %c0_i32 : i32, i32
  }
  func.func @transform_1(%arg0: i32) -> (i32, i32) {
    %c0_i32 = arith.constant 0 : i32
    %c0_i32_0 = arith.constant 0 : i32
    %c0_i32_1 = arith.constant 0 : i32
    return %c0_i32, %c0_i32_0 : i32, i32
  }
  func.func @transform_2(%arg0: i32) -> (i32, i32) {
    %c0_i32 = arith.constant 0 : i32
    %c0_i32_0 = arith.constant 0 : i32
    return %arg0, %c0_i32 : i32, i32
  }
}

</mosaic_0001>

<llo_original>
// kernel: tpu_custom_call.1
$region0: #{tpu_custom_call.1}
  #allocation0 [shape = 'u32[]', space=smem, size = 0x4, offset = 0x4, fixed_abs, tag = 'smem constant byte address 0x4 - core index']
  #allocation1 [shape = 'u32[144,128]{1,0:T(1,128)}', space=vmem, size = 0x12000, scoped, tag = 'internal scratch']
  %s0 = inlined_call_operand.hbm [shape: s32[8,8], index: 0, kind: input, shape index: {}]
  %s1 = inlined_call_operand.hbm [shape: bf16[128,256], index: 1, kind: input, shape index: {}]
  %s2 = inlined_call_operand.vmem [shape: f32[8,1], index: 2, kind: output, shape index: {}]
  %s3 = sld [smem:[#allocation0]]
  $region26: #{tpu_custom_call.1} parent=0
    _
  %s5 = ssub.s32 1, %s3
  %s6 = scalar_select 0, %s5, %s3
  $region1: #{tpu_custom_call.1} parent=0
    #allocation2 [shape = 'u8[4096]{0}', space=vmem, size = 0x1000, scoped, tag = 'input window, operand 0, single buffered']
    #allocation3 [shape = 's32[1]{0}', space=sflag, size = 0x4, scoped, tag = 'scoped memory for tpu_custom_call.1']
    #allocation4 [shape = 'u8[65536]{0}', space=vmem, size = 0x10000, scoped, tag = 'input window, operand 1, single buffered']
    #allocation5 [shape = 's32[1]{0}', space=sflag, size = 0x4, scoped, tag = 'scoped memory for tpu_custom_call.1']
    %7 = vsyncpa [#allocation3], 0
    %8 = vsyncpa [#allocation5], 0
    // Predicated region
    $region2: #{tpu_custom_call.1} parent=1 // pred_check
      _
    $region3: #{tpu_custom_call.1} parent=1 // pred_check_branch
      %10 = sbr.rel (0) target = $region5
    $region4: #{tpu_custom_call.1} parent=1 // pred_region
      %s12 = ssub.s32 128, 128
      %13 = vsyncadd [#allocation3], %s12
      %s15 = sshll.u32 [#allocation2], 4
      %s16 = int_to_ptr.vmem [resolvable:$true] %s15
      %18 = dma.hbm_to_vmem [thread:$0]  %s0, 128, %s16, [#allocation3]
    $region5: #{tpu_custom_call.1} parent=1 // pred_fallthru
      _
    // Predicated region
    $region6: #{tpu_custom_call.1} parent=1 // pred_check
      _
    $region7: #{tpu_custom_call.1} parent=1 // pred_check_branch
      %20 = sbr.rel (0) target = $region9
    $region8: #{tpu_custom_call.1} parent=1 // pred_region
      %s22 = ssub.s32 2048, 2048
      %23 = vsyncadd [#allocation5], %s22
      %s24 = sshll.u32 [#allocation4], 4
      %s25 = int_to_ptr.vmem [resolvable:$true] %s24
      %30 = dma.hbm_to_vmem [thread:$0]  %s1, 2048, %s25, [#allocation5], 128, 128, 8
    $region9: #{tpu_custom_call.1} parent=1 // pred_fallthru
      _
    // Predicated region
    $region10: #{tpu_custom_call.1} parent=1 // pred_check
      _
    $region11: #{tpu_custom_call.1} parent=1 // pred_check_branch
      %32 = sbr.rel (0) target = $region13
    $region12: #{tpu_custom_call.1} parent=1 // pred_region
      %33 = dma.done [#allocation3], 128
    $region13: #{tpu_custom_call.1} parent=1 // pred_fallthru
      _
    // Predicated region
    $region14: #{tpu_custom_call.1} parent=1 // pred_check
      _
    $region15: #{tpu_custom_call.1} parent=1 // pred_check_branch
      %35 = sbr.rel (0) target = $region17
    $region16: #{tpu_custom_call.1} parent=1 // pred_region
      %36 = dma.done [#allocation5], 2048
    $region17: #{tpu_custom_call.1} parent=1 // pred_fallthru
      _
    %v38 = vld [vmem:[#allocation2] sm:$0xff]
    %v39 = vlaneseq
    %v40 = vand.u32 %v39, 127
    %41 = vset.pattern.permute.xlu0 0
    %42 = vperm.xlu0 %41, %v38
    %v43 = vpop.permute.xlu0 %42
    %vm44 = vcmp.eq.s32.totalorder %v43, %v40
    %v45 = vsel %vm44, 1, 0
    %v46 = vcvt.s32.f32 %v45
    %v47 = vpack.c.bf16 %v46, %v46
    %v48 = vadd.bf16 %v47, 0
    %49 = vset.pattern.permute.xlu0 1
    %50 = vperm.xlu0 %49, %v38
    %v51 = vpop.permute.xlu0 %50
    %vm52 = vcmp.eq.s32.totalorder %v51, %v40
    %v53 = vsel %vm52, 1, 0
    %v54 = vcvt.s32.f32 %v53
    %v55 = vpack.c.bf16 %v54, %v54
    %v56 = vadd.bf16 %v48, %v55
    %57 = vset.pattern.permute.xlu0 2
    %58 = vperm.xlu0 %57, %v38
    %v59 = vpop.permute.xlu0 %58
    %vm60 = vcmp.eq.s32.totalorder %v59, %v40
    %v61 = vsel %vm60, 1, 0
    %v62 = vcvt.s32.f32 %v61
    %v63 = vpack.c.bf16 %v62, %v62
    %v64 = vadd.bf16 %v56, %v63
    %65 = vset.pattern.permute.xlu0 3
    %66 = vperm.xlu0 %65, %v38
    %v67 = vpop.permute.xlu0 %66
    %vm68 = vcmp.eq.s32.totalorder %v67, %v40
    %v69 = vsel %vm68, 1, 0
    %v70 = vcvt.s32.f32 %v69
    %v71 = vpack.c.bf16 %v70, %v70
    %v72 = vadd.bf16 %v64, %v71
    %73 = vset.pattern.permute.xlu0 4
    %74 = vperm.xlu0 %73, %v38
    %v75 = vpop.permute.xlu0 %74
    %vm76 = vcmp.eq.s32.totalorder %v75, %v40
    %v77 = vsel %vm76, 1, 0
    %v78 = vcvt.s32.f32 %v77
    %v79 = vpack.c.bf16 %v78, %v78
    %v80 = vadd.bf16 %v72, %v79
    %81 = vset.pattern.permute.xlu0 5
    %82 = vperm.xlu0 %81, %v38
    %v83 = vpop.permute.xlu0 %82
    %vm84 = vcmp.eq.s32.totalorder %v83, %v40
    %v85 = vsel %vm84, 1, 0
    %v86 = vcvt.s32.f32 %v85
    %v87 = vpack.c.bf16 %v86, %v86
    %v88 = vadd.bf16 %v80, %v87
    %89 = vset.pattern.permute.xlu0 6
    %90 = vperm.xlu0 %89, %v38
    %v91 = vpop.permute.xlu0 %90
    %vm92 = vcmp.eq.s32.totalorder %v91, %v40
    %v93 = vsel %vm92, 1, 0
    %v94 = vcvt.s32.f32 %v93
    %v95 = vpack.c.bf16 %v94, %v94
    %v96 = vadd.bf16 %v88, %v95
    %97 = vset.pattern.permute.xlu0 7
    %98 = vperm.xlu0 %97, %v38
    %v99 = vpop.permute.xlu0 %98
    %vm100 = vcmp.eq.s32.totalorder %v99, %v40
    %v101 = vsel %vm100, 1, 0
    %v102 = vcvt.s32.f32 %v101
    %v103 = vpack.c.bf16 %v102, %v102
    %v104 = vadd.bf16 %v96, %v103
    %v105 = vld [vmem:[#allocation4] sm:$0xff]
    %v106 = vld [vmem:[#allocation4 + $0x8] sm:$0xff]
    %v107 = vld [vmem:[#allocation4 + $0x10] sm:$0xff]
    %v108 = vld [vmem:[#allocation4 + $0x18] sm:$0xff]
    %v109 = vld [vmem:[#allocation4 + $0x20] sm:$0xff]
    %v110 = vld [vmem:[#allocation4 + $0x28] sm:$0xff]
    %v111 = vld [vmem:[#allocation4 + $0x30] sm:$0xff]
    %v112 = vld [vmem:[#allocation4 + $0x38] sm:$0xff]
    %v113 = vld [vmem:[#allocation4 + $0x40] sm:$0xff]
    %v114 = vld [vmem:[#allocation4 + $0x48] sm:$0xff]
    %v115 = vld [vmem:[#allocation4 + $0x50] sm:$0xff]
    %v116 = vld [vmem:[#allocation4 + $0x58] sm:$0xff]
    %v117 = vld [vmem:[#allocation4 + $0x60] sm:$0xff]
    %v118 = vld [vmem:[#allocation4 + $0x68] sm:$0xff]
    %v119 = vld [vmem:[#allocation4 + $0x70] sm:$0xff]
    %v120 = vld [vmem:[#allocation4 + $0x78] sm:$0xff]
    %v137 = vunpack.c.l.b16 %v105
    %v138 = vunpack.c.h.b16 %v105
    %v139 = vunpack.c.l.b16 %v106
    %v140 = vunpack.c.h.b16 %v106
    %v141 = vunpack.c.l.b16 %v107
    %v142 = vunpack.c.h.b16 %v107
    %v143 = vunpack.c.l.b16 %v108
    %v144 = vunpack.c.h.b16 %v108
    %v145 = vunpack.c.l.b16 %v109
    %v146 = vunpack.c.h.b16 %v109
    %v147 = vunpack.c.l.b16 %v110
    %v148 = vunpack.c.h.b16 %v110
    %v149 = vunpack.c.l.b16 %v111
    %v150 = vunpack.c.h.b16 %v111
    %v151 = vunpack.c.l.b16 %v112
    %v152 = vunpack.c.h.b16 %v112
    %v153 = vunpack.c.l.b16 %v113
    %v154 = vunpack.c.h.b16 %v113
    %v155 = vunpack.c.l.b16 %v114
    %v156 = vunpack.c.h.b16 %v114
    %v157 = vunpack.c.l.b16 %v115
    %v158 = vunpack.c.h.b16 %v115
    %v159 = vunpack.c.l.b16 %v116
    %v160 = vunpack.c.h.b16 %v116
    %v161 = vunpack.c.l.b16 %v117
    %v162 = vunpack.c.h.b16 %v117
    %v163 = vunpack.c.l.b16 %v118
    %v164 = vunpack.c.h.b16 %v118
    %v165 = vunpack.c.l.b16 %v119
    %v166 = vunpack.c.h.b16 %v119
    %v167 = vunpack.c.l.b16 %v120
    %v168 = vunpack.c.h.b16 %v120
    %v169 = vpack.c.b16 %v139, %v137
    %v170 = vpack.c.b16 %v140, %v138
    %v171 = vpack.c.b16 %v143, %v141
    %v172 = vpack.c.b16 %v144, %v142
    %v173 = vpack.c.b16 %v147, %v145
    %v174 = vpack.c.b16 %v148, %v146
    %v175 = vpack.c.b16 %v151, %v149
    %v176 = vpack.c.b16 %v152, %v150
    %v177 = vpack.c.b16 %v155, %v153
    %v178 = vpack.c.b16 %v156, %v154
    %v179 = vpack.c.b16 %v159, %v157
    %v180 = vpack.c.b16 %v160, %v158
    %v181 = vpack.c.b16 %v163, %v161
    %v182 = vpack.c.b16 %v164, %v162
    %v183 = vpack.c.b16 %v167, %v165
    %v184 = vpack.c.b16 %v168, %v166
    %201 = vmatprep.subr.bf16.mxu0 %v184
    %202 = vmatpush1.bf16.msra.mxu0 %v183
    %203 = vmatprep.subr.bf16.mxu0 %v182
    %204 = vmatpush1.bf16.msra.mxu0 %v181
    %205 = vmatprep.subr.bf16.mxu0 %v180
    %206 = vmatpush1.bf16.msra.mxu0 %v179
    %207 = vmatprep.subr.bf16.mxu0 %v178
    %208 = vmatpush1.bf16.msra.mxu0 %v177
    %209 = vmatprep.subr.bf16.mxu0 %v176
    %210 = vmatpush1.bf16.msra.mxu0 %v175
    %211 = vmatprep.subr.bf16.mxu0 %v174
    %212 = vmatpush1.bf16.msra.mxu0 %v173
    %213 = vmatprep.subr.bf16.mxu0 %v172
    %214 = vmatpush1.bf16.msra.mxu0 %v171
    %215 = vmatprep.subr.bf16.mxu0 %v170
    %216 = vmatpush1.bf16.msra.mxu0 %v169
    %217 = vmatprep.subr.bf16.mxu0 0
    %218 = vmatpush2.bf16.msra.mxu0 0
    %219 = vmatprep.subr.bf16.mxu0 0
    %220 = vmatpush2.bf16.msra.mxu0 0
    %221 = vmatprep.subr.bf16.mxu0 0
    %222 = vmatpush2.bf16.msra.mxu0 0
    %223 = vmatprep.subr.bf16.mxu0 0
    %224 = vmatpush2.bf16.msra.mxu0 0
    %225 = vmatprep.subr.bf16.mxu0 0
    %226 = vmatpush2.bf16.msra.mxu0 0
    %227 = vmatprep.subr.bf16.mxu0 0
    %228 = vmatpush2.bf16.msra.mxu0 0
    %229 = vmatprep.subr.bf16.mxu0 0
    %230 = vmatpush2.bf16.msra.mxu0 0
    %231 = vmatprep.subr.bf16.mxu0 0
    %232 = vmatpush2.bf16.msra.mxu0 0
    %233 = vmatprep.mubr.bf16.mxu0 0
    %234 = vmatmul.mubr.bf16.gmra.mxu0 %v104
    %v235 = vpop.f32.mrf.mxu0
    %v236 = vadd.f32 0.0, %v235
    %v237 = vpop.f32.mrf.mxu0
    %v238 = vadd.f32 0.0, %v237
    %v239 = vpop.f32.mrf.mxu0
    %v240 = vpop.f32.mrf.mxu0
    %241 = vdwg.mxu0
    %v242 = vmul.f32 %v236, %v236
    %243 = vadd.xlane.f32.xlu0 %v242
    %v244 = vpop.xlane.xlu0 %243
    %245 = vadd.xlane.f32.xlu0 %v238
    %v246 = vpop.xlane.xlu0 %245
    %v247 = vadd.f32 %v244, 8.0
    %v248 = vrsqrt.pop %v247
    %v249 = vmul.f32 %v246, %v248
    %v250 = vxor.u32 %v249, 2147483648
    %v251 = vmul.f32 %v250, 1.442695
    %v252 = vpow.pop %v251
    %v253 = vadd.f32 %v252, 1.0
    %v254 = vrcp.pop %v253
    %v255 = vmul.f32 1.0, %v254
    %vm256 = vcmask 7168
    %257 = vst.msk [vmem:[%s2] sm:$0xff] %vm256, %v255
    // Predicated region
    $region18: #{tpu_custom_call.1} parent=1 // pred_check
      _
    $region19: #{tpu_custom_call.1} parent=1 // pred_check_branch
      %259 = sbr.rel (0) target = $region21
    $region20: #{tpu_custom_call.1} parent=1 // pred_region
      _
    $region21: #{tpu_custom_call.1} parent=1 // pred_fallthru
      _
    // Predicated region
    $region22: #{tpu_custom_call.1} parent=1 // pred_check
      _
    $region23: #{tpu_custom_call.1} parent=1 // pred_check_branch
      %261 = sbr.rel (0) target = $region25
    $region24: #{tpu_custom_call.1} parent=1 // pred_region
      _
    $region25: #{tpu_custom_call.1} parent=1 // pred_fallthru
      _
    %262 = vsyncpa [#allocation3], 1
    %263 = vsyncpa [#allocation5], 1

// kernel: tpu_custom_call.1
$region0: #{tpu_custom_call.1}
  #allocation0 [shape = 'u32[]', space=smem, size = 0x4, offset = 0x4, fixed_abs, tag = 'smem constant byte address 0x4 - core index']
  #allocation1 [shape = 'u32[144,128]{1,0:T(1,128)}', space=vmem, size = 0x12000, scoped, tag = 'internal scratch']
  %s0 = inlined_call_operand.hbm [shape: s32[8,8], index: 0, kind: input, shape index: {}]
  %s1 = inlined_call_operand.hbm [shape: bf16[128,256], index: 1, kind: input, shape index: {}]
  %s2 = inlined_call_operand.vmem [shape: f32[8,1], index: 2, kind: output, shape index: {}]
  %s3 = sld [smem:[#allocation0]]
  $region26: #{tpu_custom_call.1} parent=0
    _
  %s5 = ssub.s32 1, %s3
  %s6 = scalar_select 0, %s5, %s3
  $region1: #{tpu_custom_call.1} parent=0
    #allocation2 [shape = 'u8[4096]{0}', space=vmem, size = 0x1000, scoped, tag = 'input window, operand 0, single buffered']
    #allocation3 [shape = 's32[1]{0}', space=sflag, size = 0x4, scoped, tag = 'scoped memory for tpu_custom_call.1']
    #allocation4 [shape = 'u8[65536]{0}', space=vmem, size = 0x10000, scoped, tag = 'input window, operand 1, single buffered']
    #allocation5 [shape = 's32[1]{0}', space=sflag, size = 0x4, scoped, tag = 'scoped memory for tpu_custom_call.1']
    %7 = vsyncpa [#allocation3], 0
    %8 = vsyncpa [#allocation5], 0
    // Predicated region
    $region2: #{tpu_custom_call.1} parent=1 // pred_check
      _
    $region3: #{tpu_custom_call.1} parent=1 // pred_check_branch
      %10 = sbr.rel (0) target = $region5
    $region4: #{tpu_custom_call.1} parent=1 // pred_region
      %s12 = ssub.s32 128, 128
      %13 = vsyncadd [#allocation3], %s12
      %s15 = sshll.u32 [#allocation2], 4
      %s16 = int_to_ptr.vmem [resolvable:$true] %s15
      %18 = dma.hbm_to_vmem [thread:$0]  %s0, 128, %s16, [#allocation3]
    $region5: #{tpu_custom_call.1} parent=1 // pred_fallthru
      _
    // Predicated region
    $region6: #{tpu_custom_call.1} parent=1 // pred_check
      _
    $region7: #{tpu_custom_call.1} parent=1 // pred_check_branch
      %20 = sbr.rel (0) target = $region9
    $region8: #{tpu_custom_call.1} parent=1 // pred_region
      %s22 = ssub.s32 2048, 2048
      %23 = vsyncadd [#allocation5], %s22
      %s24 = sshll.u32 [#allocation4], 4
      %s25 = int_to_ptr.vmem [resolvable:$true] %s24
      %30 = dma.hbm_to_vmem [thread:$0]  %s1, 2048, %s25, [#allocation5], 128, 128, 8
    $region9: #{tpu_custom_call.1} parent=1 // pred_fallthru
      _
    // Predicated region
    $region10: #{tpu_custom_call.1} parent=1 // pred_check
      _
    $region11: #{tpu_custom_call.1} parent=1 // pred_check_branch
      %32 = sbr.rel (0) target = $region13
    $region12: #{tpu_custom_call.1} parent=1 // pred_region
      %33 = dma.done [#allocation3], 128
    $region13: #{tpu_custom_call.1} parent=1 // pred_fallthru
      _
    // Predicated region
    $region14: #{tpu_custom_call.1} parent=1 // pred_check
      _
    $region15: #{tpu_custom_call.1} parent=1 // pred_check_branch
      %35 = sbr.rel (0) target = $region17
    $region16: #{tpu_custom_call.1} parent=1 // pred_region
      %36 = dma.done [#allocation5], 2048
    $region17: #{tpu_custom_call.1} parent=1 // pred_fallthru
      _
    %v38 = vld [vmem:[#allocation2] sm:$0xff]
    %v39 = vlaneseq
    %v40 = vand.u32 %v39, 127
    %41 = vset.pattern.permute.xlu0 0
    %42 = vperm.xlu0 %41, %v38
    %v43 = vpop.permute.xlu0 %42
    %vm44 = vcmp.eq.s32.totalorder %v43, %v40
    %v45 = vsel %vm44, 1, 0
    %v46 = vcvt.s32.f32 %v45
    %v47 = vpack.c.bf16 %v46, %v46
    %v48 = vadd.bf16 %v47, 0
    %49 = vset.pattern.permute.xlu0 1
    %50 = vperm.xlu0 %49, %v38
    %v51 = vpop.permute.xlu0 %50
    %vm52 = vcmp.eq.s32.totalorder %v51, %v40
    %v53 = vsel %vm52, 1, 0
    %v54 = vcvt.s32.f32 %v53
    %v55 = vpack.c.bf16 %v54, %v54
    %v56 = vadd.bf16 %v48, %v55
    %57 = vset.pattern.permute.xlu0 2
    %58 = vperm.xlu0 %57, %v38
    %v59 = vpop.permute.xlu0 %58
    %vm60 = vcmp.eq.s32.totalorder %v59, %v40
    %v61 = vsel %vm60, 1, 0
    %v62 = vcvt.s32.f32 %v61
    %v63 = vpack.c.bf16 %v62, %v62
    %v64 = vadd.bf16 %v56, %v63
    %65 = vset.pattern.permute.xlu0 3
    %66 = vperm.xlu0 %65, %v38
    %v67 = vpop.permute.xlu0 %66
    %vm68 = vcmp.eq.s32.totalorder %v67, %v40
    %v69 = vsel %vm68, 1, 0
    %v70 = vcvt.s32.f32 %v69
    %v71 = vpack.c.bf16 %v70, %v70
    %v72 = vadd.bf16 %v64, %v71
    %73 = vset.pattern.permute.xlu0 4
    %74 = vperm.xlu0 %73, %v38
    %v75 = vpop.permute.xlu0 %74
    %vm76 = vcmp.eq.s32.totalorder %v75, %v40
    %v77 = vsel %vm76, 1, 0
    %v78 = vcvt.s32.f32 %v77
    %v79 = vpack.c.bf16 %v78, %v78
    %v80 = vadd.bf16 %v72, %v79
    %81 = vset.pattern.permute.xlu0 5
    %82 = vperm.xlu0 %81, %v38
    %v83 = vpop.permute.xlu0 %82
    %vm84 = vcmp.eq.s32.totalorder %v83, %v40
    %v85 = vsel %vm84, 1, 0
    %v86 = vcvt.s32.f32 %v85
    %v87 = vpack.c.bf16 %v86, %v86
    %v88 = vadd.bf16 %v80, %v87
    %89 = vset.pattern.permute.xlu0 6
    %90 = vperm.xlu0 %89, %v38
    %v91 = vpop.permute.xlu0 %90
    %vm92 = vcmp.eq.s32.totalorder %v91, %v40
    %v93 = vsel %vm92, 1, 0
    %v94 = vcvt.s32.f32 %v93
    %v95 = vpack.c.bf16 %v94, %v94
    %v96 = vadd.bf16 %v88, %v95
    %97 = vset.pattern.permute.xlu0 7
    %98 = vperm.xlu0 %97, %v38
    %v99 = vpop.permute.xlu0 %98
    %vm100 = vcmp.eq.s32.totalorder %v99, %v40
    %v101 = vsel %vm100, 1, 0
    %v102 = vcvt.s32.f32 %v101
    %v103 = vpack.c.bf16 %v102, %v102
    %v104 = vadd.bf16 %v96, %v103
    %v105 = vld [vmem:[#allocation4] sm:$0xff]
    %v106 = vld [vmem:[#allocation4 + $0x8] sm:$0xff]
    %v107 = vld [vmem:[#allocation4 + $0x10] sm:$0xff]
    %v108 = vld [vmem:[#allocation4 + $0x18] sm:$0xff]
    %v109 = vld [vmem:[#allocation4 + $0x20] sm:$0xff]
    %v110 = vld [vmem:[#allocation4 + $0x28] sm:$0xff]
    %v111 = vld [vmem:[#allocation4 + $0x30] sm:$0xff]
    %v112 = vld [vmem:[#allocation4 + $0x38] sm:$0xff]
    %v113 = vld [vmem:[#allocation4 + $0x40] sm:$0xff]
    %v114 = vld [vmem:[#allocation4 + $0x48] sm:$0xff]
    %v115 = vld [vmem:[#allocation4 + $0x50] sm:$0xff]
    %v116 = vld [vmem:[#allocation4 + $0x58] sm:$0xff]
    %v117 = vld [vmem:[#allocation4 + $0x60] sm:$0xff]
    %v118 = vld [vmem:[#allocation4 + $0x68] sm:$0xff]
    %v119 = vld [vmem:[#allocation4 + $0x70] sm:$0xff]
    %v120 = vld [vmem:[#allocation4 + $0x78] sm:$0xff]
    %v137 = vunpack.c.l.b16 %v105
    %v138 = vunpack.c.h.b16 %v105
    %v139 = vunpack.c.l.b16 %v106
    %v140 = vunpack.c.h.b16 %v106
    %v141 = vunpack.c.l.b16 %v107
    %v142 = vunpack.c.h.b16 %v107
    %v143 = vunpack.c.l.b16 %v108
    %v144 = vunpack.c.h.b16 %v108
    %v145 = vunpack.c.l.b16 %v109
    %v146 = vunpack.c.h.b16 %v109
    %v147 = vunpack.c.l.b16 %v110
    %v148 = vunpack.c.h.b16 %v110
    %v149 = vunpack.c.l.b16 %v111
    %v150 = vunpack.c.h.b16 %v111
    %v151 = vunpack.c.l.b16 %v112
    %v152 = vunpack.c.h.b16 %v112
    %v153 = vunpack.c.l.b16 %v113
    %v154 = vunpack.c.h.b16 %v113
    %v155 = vunpack.c.l.b16 %v114
    %v156 = vunpack.c.h.b16 %v114
    %v157 = vunpack.c.l.b16 %v115
    %v158 = vunpack.c.h.b16 %v115
    %v159 = vunpack.c.l.b16 %v116
    %v160 = vunpack.c.h.b16 %v116
    %v161 = vunpack.c.l.b16 %v117
    %v162 = vunpack.c.h.b16 %v117
    %v163 = vunpack.c.l.b16 %v118
    %v164 = vunpack.c.h.b16 %v118
    %v165 = vunpack.c.l.b16 %v119
    %v166 = vunpack.c.h.b16 %v119
    %v167 = vunpack.c.l.b16 %v120
    %v168 = vunpack.c.h.b16 %v120
    %v169 = vpack.c.b16 %v139, %v137
    %v170 = vpack.c.b16 %v140, %v138
    %v171 = vpack.c.b16 %v143, %v141
    %v172 = vpack.c.b16 %v144, %v142
    %v173 = vpack.c.b16 %v147, %v145
    %v174 = vpack.c.b16 %v148, %v146
    %v175 = vpack.c.b16 %v151, %v149
    %v176 = vpack.c.b16 %v152, %v150
    %v177 = vpack.c.b16 %v155, %v153
    %v178 = vpack.c.b16 %v156, %v154
    %v179 = vpack.c.b16 %v159, %v157
    %v180 = vpack.c.b16 %v160, %v158
    %v181 = vpack.c.b16 %v163, %v161
    %v182 = vpack.c.b16 %v164, %v162
    %v183 = vpack.c.b16 %v167, %v165
    %v184 = vpack.c.b16 %v168, %v166
    %201 = vmatprep.subr.bf16.mxu0 %v184
    %202 = vmatpush1.bf16.msra.mxu0 %v183
    %203 = vmatprep.subr.bf16.mxu0 %v182
    %204 = vmatpush1.bf16.msra.mxu0 %v181
    %205 = vmatprep.subr.bf16.mxu0 %v180
    %206 = vmatpush1.bf16.msra.mxu0 %v179
    %207 = vmatprep.subr.bf16.mxu0 %v178
    %208 = vmatpush1.bf16.msra.mxu0 %v177
    %209 = vmatprep.subr.bf16.mxu0 %v176
    %210 = vmatpush1.bf16.msra.mxu0 %v175
    %211 = vmatprep.subr.bf16.mxu0 %v174
    %212 = vmatpush1.bf16.msra.mxu0 %v173
    %213 = vmatprep.subr.bf16.mxu0 %v172
    %214 = vmatpush1.bf16.msra.mxu0 %v171
    %215 = vmatprep.subr.bf16.mxu0 %v170
    %216 = vmatpush1.bf16.msra.mxu0 %v169
    %217 = vmatprep.subr.bf16.mxu0 0
    %218 = vmatpush2.bf16.msra.mxu0 0
    %219 = vmatprep.subr.bf16.mxu0 0
    %220 = vmatpush2.bf16.msra.mxu0 0
    %221 = vmatprep.subr.bf16.mxu0 0
    %222 = vmatpush2.bf16.msra.mxu0 0
    %223 = vmatprep.subr.bf16.mxu0 0
    %224 = vmatpush2.bf16.msra.mxu0 0
    %225 = vmatprep.subr.bf16.mxu0 0
    %226 = vmatpush2.bf16.msra.mxu0 0
    %227 = vmatprep.subr.bf16.mxu0 0
    %228 = vmatpush2.bf16.msra.mxu0 0
    %229 = vmatprep.subr.bf16.mxu0 0
    %230 = vmatpush2.bf16.msra.mxu0 0
    %231 = vmatprep.subr.bf16.mxu0 0
    %232 = vmatpush2.bf16.msra.mxu0 0
    %233 = vmatprep.mubr.bf16.mxu0 0
    %234 = vmatmul.mubr.bf16.gmra.mxu0 %v104
    %v235 = vpop.f32.mrf.mxu0
    %v236 = vadd.f32 0.0, %v235
    %v237 = vpop.f32.mrf.mxu0
    %v238 = vadd.f32 0.0, %v237
    %v239 = vpop.f32.mrf.mxu0
    %v240 = vpop.f32.mrf.mxu0
    %241 = vdwg.mxu0
    %v242 = vmul.f32 %v236, %v236
    %243 = vadd.xlane.f32.xlu0 %v242
    %v244 = vpop.xlane.xlu0 %243
    %245 = vadd.xlane.f32.xlu0 %v238
    %v246 = vpop.xlane.xlu0 %245
    %v247 = vadd.f32 %v244, 8.0
    %v248 = vrsqrt.pop %v247
    %v249 = vmul.f32 %v246, %v248
    %v250 = vxor.u32 %v249, 2147483648
    %v251 = vmul.f32 %v250, 1.442695
    %v252 = vpow.pop %v251
    %v253 = vadd.f32 %v252, 1.0
    %v254 = vrcp.pop %v253
    %v255 = vmul.f32 1.0, %v254
    %vm256 = vcmask 7168
    %257 = vst.msk [vmem:[%s2] sm:$0xff] %vm256, %v255
    // Predicated region
    $region18: #{tpu_custom_call.1} parent=1 // pred_check
      _
    $region19: #{tpu_custom_call.1} parent=1 // pred_check_branch
      %259 = sbr.rel (0) target = $region21
    $region20: #{tpu_custom_call.1} parent=1 // pred_region
      _
    $region21: #{tpu_custom_call.1} parent=1 // pred_fallthru
      _
    // Predicated region
    $region22: #{tpu_custom_call.1} parent=1 // pred_check
      _
    $region23: #{tpu_custom_call.1} parent=1 // pred_check_branch
      %261 = sbr.rel (0) target = $region25
    $region24: #{tpu_custom_call.1} parent=1 // pred_region
      _
    $region25: #{tpu_custom_call.1} parent=1 // pred_fallthru
      _
    %262 = vsyncpa [#allocation3], 1
    %263 = vsyncpa [#allocation5], 1

</llo_original>
